<compile_context>
chip_gen: v5e
topology: v5e:2x2
jax: 0.10.0
libtpu: 0.0.40
codegen_flags: <defaults>
</compile_context>

<pallas_src>
import math

import jax
import jax.numpy as jnp
from jax.experimental import pallas as pl
from jax.experimental.pallas import tpu as pltpu


# ---------------------------------------------------------------------------
# Pallas kernel: single fused matmul (tap-packed circular conv) + PE add
# ---------------------------------------------------------------------------
def _data_embedding_kernel(x3_ref, w_ref, pe_ref, o_ref):
    """One batch block (TB samples) per grid step.

    x3_ref: [TB, L, 3*c_in]      tap-packed activations
    w_ref:  [3*c_in, d_model]    packed conv weights (VMEM-resident across grid)
    pe_ref: [L, d_model]         positional table slice (VMEM-resident)
    o_ref:  [TB, L, d_model]     output block
    """
    tb, seq, k3 = x3_ref.shape
    d_model = o_ref.shape[-1]

    # Flatten batch block into the matmul M dim (free sublane merge when L % 8 == 0).
    x = x3_ref[...].reshape(tb * seq, k3)

    # Single MXU matmul, f32 accumulation.
    y = jnp.dot(x, w_ref[...], preferred_element_type=jnp.float32)   # [TB*L, d_model]

    # Fused epilogue: + positional embedding (broadcast over the batch block).
    y = y.reshape(tb, seq, d_model) + pe_ref[...].astype(jnp.float32)[None, :, :]

    o_ref[...] = y.astype(o_ref.dtype)


def _pick_batch_block(b, cap=16):
    """Largest divisor of b (<= cap), preferring >= 2 grid steps for megacore."""
    tb = 1
    for cand in range(min(b, cap), 0, -1):
        if b % cand == 0:
            tb = cand
            break
    if b > 1 and b // tb < 2:
        for cand in range(tb - 1, 0, -1):
            if b % cand == 0 and b // cand >= 2:
                tb = cand
                break
    return tb


def data_embedding_forward(x, conv_weight, pe, *, tb=None):
    """x: [B, L, c_in]; conv_weight: torch Conv1d layout [d_model, c_in, 3]; pe: [max_len, d_model]."""
    b, seq, c_in = x.shape
    d_model = conv_weight.shape[0]

    # ---- wrapper-side tap packing (no halos / rolls inside the kernel) -----
    # Circular pad of the k=3 conv == circular row shifts over the sequence:
    #   tap k=0 reads x[(l-1) mod L], k=1 reads x[l], k=2 reads x[(l+1) mod L].
    x3 = jnp.concatenate(
        [jnp.roll(x, 1, axis=1), x, jnp.roll(x, -1, axis=1)], axis=-1)       # [B, L, 3*c_in]

    # Torch conv weight [O, I, K] -> packed matmul weight [K*I, O] matching the
    # concat order above (tap index leads, then channel).
    w = jnp.transpose(conv_weight, (2, 1, 0)).reshape(3 * c_in, d_model)
    w = w.astype(x.dtype)                                                    # native MXU dtype

    pe_l = pe[:seq].astype(jnp.float32)                                      # [L, d_model]

    if tb is None:
        tb = _pick_batch_block(b)
    grid = (b // tb,)

    # VMEM budget: double-buffered in/out blocks + resident weights/PE table.
    itemsize = jnp.dtype(x.dtype).itemsize
    block_bytes = (
        2 * tb * seq * 3 * c_in * itemsize          # input block, double-buffered
        + 2 * tb * seq * d_model * itemsize         # output block, double-buffered
        + 3 * c_in * d_model * itemsize             # weights (resident)
        + seq * d_model * 4                         # PE table (resident, f32)
    )
    vmem_limit = int(min(64 * 1024 * 1024, max(2 * block_bytes, 16 * 1024 * 1024)))

    return pl.pallas_call(
        _data_embedding_kernel,
        grid=grid,
        in_specs=[
            pl.BlockSpec((tb, seq, 3 * c_in), lambda i: (i, 0, 0)),          # per-step batch block
            pl.BlockSpec((3 * c_in, d_model), lambda i: (0, 0)),             # weights: resident
            pl.BlockSpec((seq, d_model), lambda i: (0, 0)),                  # pos. table: resident
        ],
        out_specs=pl.BlockSpec((tb, seq, d_model), lambda i: (i, 0, 0)),
        out_shape=jax.ShapeDtypeStruct((b, seq, d_model), x.dtype),
        compiler_params=pltpu.CompilerParams(
            dimension_semantics=("parallel",),
            vmem_limit_bytes=vmem_limit,
        ),
    )(x3, w, pe_l)


# ---------------------------------------------------------------------------
# PositionalEmbedding table (matches the torch buffer construction)
# ---------------------------------------------------------------------------
def make_positional_embedding(max_len, d_model):
    position = jnp.arange(max_len, dtype=jnp.float32)[:, None]                 # [max_len, 1]
    div_term = jnp.exp(jnp.arange(0, d_model, 2, dtype=jnp.float32)
                       * -(math.log(10000.0) / d_model))                       # [d_model//2]
    ang = position * div_term                                                  # [max_len, d_model//2]
    pe = jnp.zeros((max_len, d_model), jnp.float32)
    pe = pe.at[:, 0::2].set(jnp.sin(ang))
    pe = pe.at[:, 1::2].set(jnp.cos(ang))
    return pe


# ---------------------------------------------------------------------------
# Pure-JAX reference (torch semantics: circular pad + Conv1d + PE add)
# ---------------------------------------------------------------------------
def data_embedding_ref(x, conv_weight, pe):
    b, seq, c_in = x.shape
    xt = jnp.transpose(x, (0, 2, 1))                                      # [B, c_in, L]
    xt_pad = jnp.concatenate([xt[:, :, -1:], xt, xt[:, :, :1]], axis=-1)  # circular pad 1
    y = jax.lax.conv_general_dilated(
        xt_pad, conv_weight,                                              # weight [O, I, K]
        window_strides=(1,), padding="VALID",
        dimension_numbers=("NCH", "OIH", "NCH"))                          # [B, d_model, L]
    y = jnp.transpose(y, (0, 2, 1))                                       # [B, L, d_model]
    return y + pe[None, :seq]


if __name__ == "__main__":
    B, L, C_IN, D_MODEL = 2, 8, 4, 32

    key = jax.random.PRNGKey(0)
    k_x, k_w = jax.random.split(key)
    x = jax.random.normal(k_x, (B, L, C_IN), dtype=jnp.float32)

    # Kaiming-normal-ish init for the conv weight (fan_in = c_in * kernel_size).
    fan_in = C_IN * 3
    conv_w = (jnp.sqrt(2.0 / fan_in)
              * jax.random.normal(k_w, (D_MODEL, C_IN, 3))).astype(jnp.float32)

    pe = make_positional_embedding(5000, D_MODEL)

    fwd = jax.jit(data_embedding_forward)
    out = jax.block_until_ready(fwd(x, conv_w, pe))

    assert out.shape == (B, L, D_MODEL) and out.dtype == jnp.float32

    ref = data_embedding_ref(x, conv_w, pe)
    max_err = float(jnp.max(jnp.abs(out - ref)))
    assert max_err < 1e-3, f"mismatch vs reference: {max_err}"

    print("KERNEL_OK")
</pallas_src>

<mosaic_0001>
module attributes {stable_mosaic.version = 11 : i64} {
  func.func @_data_embedding_kernel(%arg0: i32, %arg1: memref<1x8x12xf32, #tpu.memory_space<vmem>>, %arg2: memref<12x32xf32, #tpu.memory_space<vmem>>, %arg3: memref<8x32xf32, #tpu.memory_space<vmem>>, %arg4: memref<1x8x32xf32, #tpu.memory_space<vmem>>) attributes {dimension_semantics = [#tpu.dimension_semantics<parallel>], iteration_bounds = array<i64: 2>, scalar_prefetch = 0 : i64, scratch_operands = 0 : i64, tpu.core_type = #tpu.core_type<tc>, window_params = [{transform_indices = @transform_0, window_bounds = array<i64: 1, 8, 12>}, {pipeline_mode = #tpu.pipeline_mode<synchronous>, transform_indices = @transform_1, window_bounds = array<i64: 12, 32>}, {pipeline_mode = #tpu.pipeline_mode<synchronous>, transform_indices = @transform_2, window_bounds = array<i64: 8, 32>}, {transform_indices = @transform_3, window_bounds = array<i64: 1, 8, 32>}]} {
    %c0 = arith.constant 0 : index
    %c0_0 = arith.constant 0 : index
    %c0_1 = arith.constant 0 : index
    %0 = vector.load %arg1[%c0, %c0_0, %c0_1] : memref<1x8x12xf32, #tpu.memory_space<vmem>>, vector<1x8x12xf32>
    %1 = vector.shape_cast %0 : vector<1x8x12xf32> to vector<8x12xf32>
    %c0_2 = arith.constant 0 : index
    %c0_3 = arith.constant 0 : index
    %2 = vector.load %arg2[%c0_2, %c0_3] : memref<12x32xf32, #tpu.memory_space<vmem>>, vector<12x32xf32>
    %cst = arith.constant dense<0.000000e+00> : vector<8x32xf32>
    %3 = tpu.matmul %1, %2, %cst {dimension_numbers = #tpu.dot_dimension_numbers<[1], [0], [0], [1], [0, 0, 1, 1], [], []>} : vector<8x12xf32>, vector<12x32xf32>, vector<8x32xf32> -> vector<8x32xf32>
    %4 = vector.shape_cast %3 : vector<8x32xf32> to vector<1x8x32xf32>
    %c0_4 = arith.constant 0 : index
    %c0_5 = arith.constant 0 : index
    %5 = vector.load %arg3[%c0_4, %c0_5] : memref<8x32xf32, #tpu.memory_space<vmem>>, vector<8x32xf32>
    %6 = vector.shape_cast %5 : vector<8x32xf32> to vector<1x8x32xf32>
    %7 = arith.addf %4, %6 : vector<1x8x32xf32>
    %c0_6 = arith.constant 0 : index
    %c0_7 = arith.constant 0 : index
    %c0_8 = arith.constant 0 : index
    %8 = vector.load %arg4[%c0_6, %c0_7, %c0_8] : memref<1x8x32xf32, #tpu.memory_space<vmem>>, vector<1x8x32xf32>
    tpu.vector_store %arg4[%c0_6, %c0_7, %c0_8], %7 {strides = array<i32>} : memref<1x8x32xf32, #tpu.memory_space<vmem>>, vector<1x8x32xf32>,
    return
  }
  func.func @transform_0(%arg0: i32) -> (i32, i32, i32) {
    %c0_i32 = arith.constant 0 : i32
    %c0_i32_0 = arith.constant 0 : i32
    %c0_i32_1 = arith.constant 0 : i32
    return %arg0, %c0_i32, %c0_i32_0 : i32, i32, i32
  }
  func.func @transform_1(%arg0: i32) -> (i32, i32) {
    %c0_i32 = arith.constant 0 : i32
    %c0_i32_0 = arith.constant 0 : i32
    %c0_i32_1 = arith.constant 0 : i32
    return %c0_i32, %c0_i32_0 : i32, i32
  }
  func.func @transform_2(%arg0: i32) -> (i32, i32) {
    %c0_i32 = arith.constant 0 : i32
    %c0_i32_0 = arith.constant 0 : i32
    %c0_i32_1 = arith.constant 0 : i32
    return %c0_i32, %c0_i32_0 : i32, i32
  }
  func.func @transform_3(%arg0: i32) -> (i32, i32, i32) {
    %c0_i32 = arith.constant 0 : i32
    %c0_i32_0 = arith.constant 0 : i32
    %c0_i32_1 = arith.constant 0 : i32
    return %arg0, %c0_i32, %c0_i32_0 : i32, i32, i32
  }
}

</mosaic_0001>

<llo_original>
// kernel: data_embedding_forward.1
$region0: #{data_embedding_forward.1}
  #allocation0 [shape = 'u32[]', space=smem, size = 0x4, offset = 0x4, fixed_abs, tag = 'smem constant byte address 0x4 - core index']
  #allocation1 [shape = 'u32[72,128]{1,0:T(1,128)}', space=vmem, size = 0x9000, scoped, tag = 'internal scratch']
  %s0 = inlined_call_operand.vmem [shape: f32[2,8,12], index: 0, kind: input, shape index: {}]
  %s1 = inlined_call_operand.vmem [shape: f32[12,32], index: 1, kind: input, shape index: {}]
  %s2 = inlined_call_operand.vmem [shape: f32[8,32], index: 2, kind: input, shape index: {}]
  %s3 = inlined_call_operand.hbm [shape: f32[2,8,32], index: 3, kind: output, shape index: {}]
  %s4 = sld [smem:[#allocation0]]
  $region45: #{data_embedding_forward.1} parent=0
    _
  %s6 = ssub.s32 1, %s4
  %s7 = scalar_select 0, %s6, %s4
  $region1: #{data_embedding_forward.1} parent=0
    #allocation2 [shape = 'u8[8192]{0}', space=vmem, size = 0x2000, scoped, tag = 'output window, operand 0']
    #allocation3 [shape = 's32[2]{0}', space=sflag, size = 0x8, scoped, tag = 'scoped memory for data_embedding_forward.1']
    %8 = vsyncpa [#allocation3], 0
    %s9 = scalar_lea.sflag [#allocation3], 1
    %10 = vsyncpa %s9, 0
    loop: start=0, step=1, limit=4
    $region2: #{data_embedding_forward.1} parent=1 // loop_pre_header
      _
    $region3: #{data_embedding_forward.1} parent=1 // loop_header
      %s12 = sphi 0, %s16
      %p13 = scmp.ge.s32.totalorder %s12, 4
      %s22 = sphi 0, %s24
      %s25 = sphi 0, %s22
      %s26 = sphi 0, %s25
      %s42 = sphi 0, %s26
      %s46 = sphi 0, %s46
      %s48 = sphi 0, %s46
      %s49 = sphi 0, %s48
      %s63 = sphi 0, %s49
      %s67 = sphi 0, %s67
      %s69 = sphi 0, %s67
      %s70 = sphi 0, %s69
      %s84 = sphi 0, %s70
      %s90 = sphi 0, %s92
      %s93 = sphi 0, %s90
      %s94 = sphi 0, %s93
      %s110 = sphi 0, %s94
    $region4: #{data_embedding_forward.1} parent=1 // loop_header_branch
      %15 = sbr.rel (%p13) target = $region8
    $region5: #{data_embedding_forward.1} parent=1 // loop_body
      %s17 = ssub.s32 %s12, 1
      %s18 = ssub.s32 %s12, 2
      %s19 = sadd.s32 %s12, 1
      %s20 = ssub.s32 %s12, %s19
      %p21 = scmp.eq.s32.totalorder %s20, 0
      %s23 = sadd.s32 %s22, 1
      %s24 = scalar_select %p21, %s22, %s23
      %p27 = pneg %p21
      %p28 = scmp.eq.s32.totalorder %s12, 1
      %p29 = por %p27, %p28
      %p30 = scmp.ne.s32.totalorder %s22, %s25
      %p31 = scmp.eq.s32.totalorder %s12, 0
      %p32 = por %p30, %p31
      %p33 = scmp.ne.s32.totalorder %s22, %s25
      %p34 = scmp.eq.s32.totalorder %s17, 1
      %p35 = por %p33, %p34
      %p36 = scmp.ne.s32.totalorder %s25, %s26
      %p37 = scmp.eq.s32.totalorder %s17, 0
      %p38 = por %p36, %p37
      %p39 = scmp.ne.s32.totalorder %s25, %s26
      %p40 = scmp.eq.s32.totalorder %s18, 1
      %p41 = por %p39, %p40
      %p43 = scmp.ne.s32.totalorder %s26, %s42
      %p44 = scmp.eq.s32.totalorder %s18, 0
      %p45 = por %p43, %p44
      %s47 = sadd.s32 %s46, 1
      %p50 = scmp.eq.s32.totalorder %s12, 1
      %p51 = scmp.ne.s32.totalorder %s46, %s48
      %p52 = scmp.eq.s32.totalorder %s12, 0
      %p53 = por %p51, %p52
      %p54 = scmp.ne.s32.totalorder %s46, %s48
      %p55 = scmp.eq.s32.totalorder %s17, 1
      %p56 = por %p54, %p55
      %p57 = scmp.ne.s32.totalorder %s48, %s49
      %p58 = scmp.eq.s32.totalorder %s17, 0
      %p59 = por %p57, %p58
      %p60 = scmp.ne.s32.totalorder %s48, %s49
      %p61 = scmp.eq.s32.totalorder %s18, 1
      %p62 = por %p60, %p61
      %p64 = scmp.ne.s32.totalorder %s49, %s63
      %p65 = scmp.eq.s32.totalorder %s18, 0
      %p66 = por %p64, %p65
      %s68 = sadd.s32 %s67, 1
      %p71 = scmp.eq.s32.totalorder %s12, 1
      %p72 = scmp.ne.s32.totalorder %s67, %s69
      %p73 = scmp.eq.s32.totalorder %s12, 0
      %p74 = por %p72, %p73
      %p75 = scmp.ne.s32.totalorder %s67, %s69
      %p76 = scmp.eq.s32.totalorder %s17, 1
      %p77 = por %p75, %p76
      %p78 = scmp.ne.s32.totalorder %s69, %s70
      %p79 = scmp.eq.s32.totalorder %s17, 0
      %p80 = por %p78, %p79
      %p81 = scmp.ne.s32.totalorder %s69, %s70
      %p82 = scmp.eq.s32.totalorder %s18, 1
      %p83 = por %p81, %p82
      %p85 = scmp.ne.s32.totalorder %s70, %s84
      %p86 = scmp.eq.s32.totalorder %s18, 0
      %p87 = por %p85, %p86
      %s88 = ssub.s32 %s12, %s19
      %p89 = scmp.eq.s32.totalorder %s88, 0
      %s91 = sadd.s32 %s90, 1
      %s92 = scalar_select %p89, %s90, %s91
      %p95 = pneg %p89
      %p96 = scmp.eq.s32.totalorder %s12, 1
      %p97 = por %p95, %p96
      %p98 = scmp.ne.s32.totalorder %s90, %s93
      %p99 = scmp.eq.s32.totalorder %s12, 0
      %p100 = por %p98, %p99
      %p101 = scmp.ne.s32.totalorder %s90, %s93
      %p102 = scmp.eq.s32.totalorder %s17, 1
      %p103 = por %p101, %p102
      %p104 = scmp.ne.s32.totalorder %s93, %s94
      %p105 = scmp.eq.s32.totalorder %s17, 0
      %p106 = por %p104, %p105
      %p107 = scmp.ne.s32.totalorder %s93, %s94
      %p108 = scmp.eq.s32.totalorder %s18, 1
      %p109 = por %p107, %p108
      %p111 = scmp.ne.s32.totalorder %s94, %s110
      %p112 = scmp.eq.s32.totalorder %s18, 0
      %p113 = por %p111, %p112
      %p114 = scmp.le.s32.totalorder 1, %s12
      %p115 = scmp.lt.s32.totalorder %s12, 3
      %p116 = pnand %p114, %p115
      %p117 = pneg %p116
      // Predicated region
      $region9: #{data_embedding_forward.1} parent=5 // pred_check
        _
      $region10: #{data_embedding_forward.1} parent=5 // pred_check_branch
        %119 = sbr.rel (%p116) target = $region12
      $region11: #{data_embedding_forward.1} parent=5 // pred_region
        %s120 = ssub.s32 %s12, 1
        // Predicated region
        $region13: #{data_embedding_forward.1} parent=11 // pred_check
          %p121 = pneg %p59
        $region14: #{data_embedding_forward.1} parent=11 // pred_check_branch
          %123 = sbr.rel (%p121) target = $region16
        $region15: #{data_embedding_forward.1} parent=11 // pred_region
          _
        $region16: #{data_embedding_forward.1} parent=11 // pred_fallthru
          _
        // Predicated region
        $region17: #{data_embedding_forward.1} parent=11 // pred_check
          %p124 = pneg %p80
        $region18: #{data_embedding_forward.1} parent=11 // pred_check_branch
          %126 = sbr.rel (%p124) target = $region20
        $region19: #{data_embedding_forward.1} parent=11 // pred_region
          _
        $region20: #{data_embedding_forward.1} parent=11 // pred_fallthru
          _
      $region12: #{data_embedding_forward.1} parent=5 // pred_fallthru
        _
      %p127 = scmp.lt.s32.totalorder %s12, 2
      // Predicated region
      $region21: #{data_embedding_forward.1} parent=5 // pred_check
        %p128 = pneg %p127
      $region22: #{data_embedding_forward.1} parent=5 // pred_check_branch
        %130 = sbr.rel (%p128) target = $region24
      $region23: #{data_embedding_forward.1} parent=5 // pred_region
        // Predicated region
        $region25: #{data_embedding_forward.1} parent=23 // pred_check
          %p131 = pneg %p32
        $region26: #{data_embedding_forward.1} parent=23 // pred_check_branch
          %133 = sbr.rel (%p131) target = $region28
        $region27: #{data_embedding_forward.1} parent=23 // pred_region
          %p134 = scmp.lt.s32.totalorder %s12, 1
          %s135 = scalar_select %p134, %s12, 1
          %s136 = smul.addr %s135, 8
          %s137 = scalar_lea.vmem %s0, %s136
        $region28: #{data_embedding_forward.1} parent=23 // pred_fallthru
          _
      $region24: #{data_embedding_forward.1} parent=5 // pred_fallthru
        _
      %p138 = scmp.le.s32.totalorder 1, %s12
      %p139 = scmp.lt.s32.totalorder %s12, 3
      %p140 = pnand %p138, %p139
      %p141 = pneg %p140
      // Predicated region
      $region29: #{data_embedding_forward.1} parent=5 // pred_check
        _
      $region30: #{data_embedding_forward.1} parent=5 // pred_check_branch
        %143 = sbr.rel (%p140) target = $region32
      $region31: #{data_embedding_forward.1} parent=5 // pred_region
        %s144 = ssub.s32 %s12, 1
        %p145 = scmp.lt.s32.totalorder %s17, 1
        %s146 = scalar_select %p145, %s17, 1
        %s147 = smul.addr %s146, 8
        %s148 = scalar_lea.vmem %s0, %s147
        %p149 = pneg %p38
        %p150 = pneg %p35
        %p151 = pneg %p59
        %p152 = pneg %p56
        %p153 = pneg %p80
        %p154 = pneg %p77
        %p155 = pneg %p106
        %p156 = pneg %p103
        %s157 = sand.u32 %s93, 1
        %s158 = scalar_lea.sflag [#allocation3], %s157
        %s159 = sand.u32 %s93, 1
        %s160 = smul.addr %s159, 8
        %s161 = scalar_lea.vmem [#allocation2], %s160
        %p162 = scmp.lt.s32.totalorder %s17, 1
        %s163 = scalar_select %p162, %s17, 1
        %s164 = smul.addr %s163, 8
        %s165 = scalar_lea.vmem %s0, %s164
        %v166 = vld [vmem:[%s165] sm:$0xff]
        %v167 = vld [vmem:[%s1] sm:$0xff]
        %v168 = vld [vmem:[%s1 + $0x8] sm:$0xf]
        %vm169 = vcmask 97280
        %v171 = vsel %vm169, %v166, 0
        %vm173 = vcmask 1043456
        %v175 = vsel %vm173, %v168, 0
        %177 = vmatpush.msra.mxu0 0.0
        %178 = vmatpush.msra.mxu0 0.0
        %179 = vmatpush.msra.mxu0 0.0
        %180 = vmatpush.msra.mxu0 0.0
        %181 = vmatpush.msra.mxu0 0.0
        %182 = vmatpush.msra.mxu0 0.0
        %183 = vmatpush.msra.mxu0 0.0
        %184 = vmatpush.msra.mxu0 0.0
        %185 = vmatpush.msra.mxu0 0.0
        %186 = vmatpush.msra.mxu0 0.0
        %187 = vmatpush.msra.mxu0 0.0
        %188 = vmatpush.msra.mxu0 0.0
        %189 = vmatpush.msra.mxu0 0.0
        %190 = vmatpush.msra.mxu0 0.0
        %191 = vmatpush.msra.mxu0 %v175
        %192 = vmatpush.msra.mxu0 %v167
        %193 = vmatmul.f32.gmra.mxu0 %v171
        %v194 = vpop.f32.mrf.mxu0
        %v195 = vadd.f32 0.0, %v194
        %196 = vdwg.mxu0
        %v197 = vld [vmem:[%s2] sm:$0xff]
        %v198 = vadd.f32 %v195, %v197
        %vm199 = vcmask 261120
        %200 = vst.msk [vmem:[%s161] sm:$0xff] %vm199, %v198
        %s201 = sand.u32 %s93, 1
        %s202 = scalar_lea.sflag [#allocation3], %s201
        %s203 = sand.u32 %s93, 1
        %s204 = smul.addr %s203, 8
        %s205 = scalar_lea.vmem [#allocation2], %s204
        // Predicated region
        $region33: #{data_embedding_forward.1} parent=31 // pred_check
          %p206 = pneg %p103
        $region34: #{data_embedding_forward.1} parent=31 // pred_check_branch
          %208 = sbr.rel (%p206) target = $region36
        $region35: #{data_embedding_forward.1} parent=31 // pred_region
          %210 = vsyncadd %s202, 0
          %s211 = smul.addr %s17, 8
          %s212 = scalar_lea.hbm %s3, %s211
          %s214 = sshll.u32 %s205, 4
          %s215 = int_to_ptr.vmem [resolvable:$true] %s214
          %s216 = sshll.u32 %s212, 4
          %s217 = int_to_ptr.hbm [resolvable:$true] %s216
          %219 = dma.vmem_to_hbm [thread:$0]  %s215, 128, %s217, %s202
        $region36: #{data_embedding_forward.1} parent=31 // pred_fallthru
          _
      $region32: #{data_embedding_forward.1} parent=5 // pred_fallthru
        _
      %p220 = scmp.le.s32.totalorder 2, %s12
      // Predicated region
      $region37: #{data_embedding_forward.1} parent=5 // pred_check
        %p221 = pneg %p220
      $region38: #{data_embedding_forward.1} parent=5 // pred_check_branch
        %223 = sbr.rel (%p221) target = $region40
      $region39: #{data_embedding_forward.1} parent=5 // pred_region
        %s224 = ssub.s32 %s12, 2
        // Predicated region
        $region41: #{data_embedding_forward.1} parent=39 // pred_check
          %p225 = pneg %p109
        $region42: #{data_embedding_forward.1} parent=39 // pred_check_branch
          %227 = sbr.rel (%p225) target = $region44
        $region43: #{data_embedding_forward.1} parent=39 // pred_region
          %s228 = sand.u32 %s94, 1
          %s229 = scalar_lea.sflag [#allocation3], %s228
          %s230 = sand.u32 %s94, 1
          %s231 = smul.addr %s230, 8
          %s232 = scalar_lea.vmem [#allocation2], %s231
          %234 = dma.done %s229, 128
        $region44: #{data_embedding_forward.1} parent=39 // pred_fallthru
          _
      $region40: #{data_embedding_forward.1} parent=5 // pred_fallthru
        _
    $region6: #{data_embedding_forward.1} parent=1 // loop_footer
      %s16 = sadd.s32 1, %s12
    $region7: #{data_embedding_forward.1} parent=1 // loop_footer_branch
      %11 = sbr.rel target = $region3
    $region8: #{data_embedding_forward.1} parent=1 // loop_exit
      _
    %235 = vsyncpa [#allocation3], 1
    %s236 = scalar_lea.sflag [#allocation3], 1
    %237 = vsyncpa %s236, 1

</llo_original>
